<compile_context>
chip_gen: v5e
topology: v5e:2x2
jax: 0.10.0
libtpu: 0.0.40
codegen_flags: <defaults>
</compile_context>

<pallas_src>
import math

import jax
import jax.numpy as jnp
from jax.experimental import pallas as pl
from jax.experimental.pallas import tpu as pltpu


# ----------------------------------------------------------------------------
# Pallas kernel: per-block lane-wise partial sums of |f - r|
# ----------------------------------------------------------------------------
def _abs_diff_rowsum_kernel(f_ref, r_ref, out_ref):
    x = f_ref[...].astype(jnp.float32)   # (bm, 128), exact f32 difference
    y = r_ref[...].astype(jnp.float32)
    # Sublane-only reduce: stays in the VPU slots (no cross-lane XLU tree and
    # no scalar re-broadcast per step).  (128,) lane partials for this block.
    s = jnp.sum(jnp.abs(x - y), axis=0)
    out_ref[...] = s.reshape(out_ref.shape)


def _vmem_block_budget():
    """Generation-aware per-input block budget (bytes)."""
    cap = 64 << 20                      # v7x has the smallest VMEM (64 MiB/TC)
    try:
        cap = int(getattr(pltpu.get_tpu_info(), "vmem_capacity_bytes", cap))
    except Exception:
        pass
    # 2 inputs x 2 pipeline buffers + f32 intermediates + output headroom;
    # also keeps us far below v5e's 16 MiB default scoped-VMEM limit.
    return max(512 << 10, min(cap // 16, 2 << 20))


def _pick_block_rows(rows_per_layer, lane, itemsize, budget_bytes):
    """Largest sublane-aligned block height that (a) divides every layer's row
    count (no block straddles a layer), (b) fits the VMEM budget, and
    (c) prefers an even grid >= 4 (both v7x TCs busy with >= 2 steps each).
    Returns None if no legal block height exists."""
    g = 0
    for r in rows_per_layer:
        g = math.gcd(g, int(r))
    total = int(sum(rows_per_layer))
    max_rows = max(8, budget_bytes // (lane * itemsize))
    cands = [d for d in range(8, g + 1, 8) if g % d == 0 and d <= max_rows]
    if not cands:
        return None
    even4 = [d for d in cands if (total // d) >= 4 and (total // d) % 2 == 0]
    if even4:
        return max(even4)
    ge2 = [d for d in cands if (total // d) >= 2]
    return max(ge2) if ge2 else max(cands)


def _fused_abs_partials(f_all, r_all, bm):
    """Single pallas_call over all layers' flattened (rows, 128) features.
    Returns (grid, 1, 128) f32 per-block lane partial sums of |f - r|."""
    m, lane = f_all.shape
    grid = (m // bm,)
    itemsize = jnp.dtype(f_all.dtype).itemsize
    cost = pl.CostEstimate(
        flops=3 * m * lane,
        transcendentals=0,
        bytes_accessed=2 * m * lane * itemsize + grid[0] * 128 * 4,
    )
    return pl.pallas_call(
        _abs_diff_rowsum_kernel,
        out_shape=jax.ShapeDtypeStruct((grid[0], 1, 128), jnp.float32),
        grid_spec=pltpu.PrefetchScalarGridSpec(
            num_scalar_prefetch=0,
            grid=grid,
            in_specs=[
                pl.BlockSpec((bm, lane), lambda i: (i, 0)),
                pl.BlockSpec((bm, lane), lambda i: (i, 0)),
            ],
            # Each step owns a disjoint (1, 1, 128) partial -> safe to mark
            # the grid axis "parallel" (sharded across both TCs on v7x).
            out_specs=pl.BlockSpec((1, 1, 128), lambda i: (i, 0, 0)),
        ),
        compiler_params=pltpu.CompilerParams(
            dimension_semantics=("parallel",),
            vmem_limit_bytes=32 * 1024 * 1024,
        ),
        cost_estimate=cost,
    )(f_all, r_all)


# ----------------------------------------------------------------------------
# Deterministic synthetic feature extractor (plain JAX glue, VGG-like stack)
# ----------------------------------------------------------------------------
def init_extractor_params(key):
    # sequential layer spec: conv / relu / pool (indices match `layers`)
    specs = [(3, 8), "relu", (8, 8), "relu", "pool",
             (8, 16), "relu", (16, 16), "relu", "pool"]
    params = []
    for s in specs:
        if isinstance(s, tuple):
            cin, cout = s
            key, kw = jax.random.split(key)
            w = jax.random.normal(kw, (cout, cin, 3, 3), jnp.float32)
            w = w * (1.0 / (cin * 9.0)) ** 0.5
            key, kb = jax.random.split(key)
            b = 0.01 * jax.random.normal(kb, (cout,), jnp.float32)
            params.append((w, b))
        else:
            params.append(None)
    return specs, params


def feat_extractor(x, layers, specs, params):
    feats = []
    for i, s in enumerate(specs):
        if isinstance(s, tuple):
            w, b = params[i]
            w = w.astype(x.dtype)           # bf16 weights -> bf16 MXU conv
            b = b.astype(x.dtype)
            x = jax.lax.conv_general_dilated(
                x, w, window_strides=(1, 1), padding="SAME",
                dimension_numbers=("NCHW", "OIHW", "NCHW"))
            x = x + b[None, :, None, None]
        elif s == "pool":
            x = jax.lax.reduce_window(
                x, jnp.array(-jnp.inf, dtype=x.dtype), jax.lax.max,
                window_dimensions=(1, 1, 2, 2),
                window_strides=(1, 1, 2, 2), padding="VALID")
        else:  # relu
            x = jnp.maximum(x, 0.0)
        if i in layers:
            feats.append(x)
    return feats


# ----------------------------------------------------------------------------
# PerceptualLoss.forward equivalent
# ----------------------------------------------------------------------------
def perceptual_loss(imgs, recon_imgs, specs, params, *, weight=1.0,
                    layers=(0, 2, 5, 9)):
    B, C = imgs.shape[0], imgs.shape[1]

    # Fused extractor pass over [imgs; recon] in a bf16 feature path.
    x = jnp.concatenate([imgs, recon_imgs], axis=0).astype(jnp.bfloat16)
    # F.interpolate(x, (224, 224)) -- nearest-neighbor (PyTorch default mode).
    # TODO(synk): jax.image.resize(method="nearest") uses a floor index map,
    # which can differ from PyTorch F.interpolate(mode='nearest') by one px.
    x = jax.image.resize(x, (2 * B, C, 224, 224), method="nearest")

    feats = feat_extractor(x, layers, specs, params)

    lane = 128
    pallas_pairs = []   # (flat_feat, flat_recon_feat, n_elems, n_rows)
    xla_pairs = []
    for f in feats:
        fa, fb = f[:B], f[B:]              # imgs half / recon half
        n = int(fa.size)
        if n % lane == 0:
            pallas_pairs.append((fa.reshape(n // lane, lane),
                                 fb.reshape(n // lane, lane), n, n // lane))
        else:
            xla_pairs.append((fa, fb))

    loss = jnp.float32(0.0)

    if pallas_pairs:
        rows = [p[3] for p in pallas_pairs]
        itemsize = jnp.dtype(feats[0].dtype).itemsize
        bm = _pick_block_rows(rows, lane, itemsize, _vmem_block_budget())
        if bm is None:
            xla_pairs.extend((p[0], p[1]) for p in pallas_pairs)
        else:
            # Single lane-dense slab per side; the cast/slice/reshape fuse
            # into this concatenate on the XLA side.
            f_all = jnp.concatenate([p[0] for p in pallas_pairs], axis=0)
            r_all = jnp.concatenate([p[1] for p in pallas_pairs], axis=0)
            partials = _fused_abs_partials(f_all, r_all, bm)   # (grid,1,128)
            off = 0
            for _, _, n, r in pallas_pairs:
                nblk = r // bm
                layer_sum = jnp.sum(partials[off:off + nblk])
                loss = loss + layer_sum / jnp.float32(n)       # mean |f - r|
                off += nblk

    for fa, fb in xla_pairs:
        # TODO(synk): layer not 128-lane tileable; let XLA fuse the reduction.
        loss = loss + jnp.mean(jnp.abs(fa.astype(jnp.float32) -
                                       fb.astype(jnp.float32)))

    return weight * loss


if __name__ == "__main__":
    key = jax.random.PRNGKey(0)
    k_img, k_rec, k_par = jax.random.split(key, 3)

    imgs = jax.random.uniform(k_img, (2, 3, 16, 16), jnp.float32)
    recon_imgs = jax.random.uniform(k_rec, (2, 3, 16, 16), jnp.float32)

    specs, params = init_extractor_params(k_par)

    loss_fn = jax.jit(
        lambda a, b, p: perceptual_loss(a, b, specs, p, weight=1.0,
                                        layers=(0, 2, 5, 9)))
    loss = loss_fn(imgs, recon_imgs, params)
    jax.block_until_ready(loss)
    print("KERNEL_OK")
</pallas_src>

<mosaic_0001>
module attributes {stable_mosaic.version = 11 : i64} {
  func.func @_abs_diff_rowsum_kernel(%arg0: i32, %arg1: memref<392x128xbf16, #tpu.memory_space<vmem>>, %arg2: memref<392x128xbf16, #tpu.memory_space<vmem>>, %arg3: memref<1x1x128xf32, #tpu.memory_space<vmem>>) attributes {dimension_semantics = [#tpu.dimension_semantics<parallel>], iteration_bounds = array<i64: 42>, scalar_prefetch = 0 : i64, scratch_operands = 0 : i64, tpu.core_type = #tpu.core_type<tc>, window_params = [{transform_indices = @transform_0, window_bounds = array<i64: 392, 128>}, {transform_indices = @transform_1, window_bounds = array<i64: 392, 128>}, {transform_indices = @transform_2, window_bounds = array<i64: 1, 1, 128>}]} {
    %c0 = arith.constant 0 : index
    %c0_0 = arith.constant 0 : index
    %0 = vector.load %arg1[%c0, %c0_0] : memref<392x128xbf16, #tpu.memory_space<vmem>>, vector<392x128xbf16>
    %1 = arith.extf %0 : vector<392x128xbf16> to vector<392x128xf32>
    %c0_1 = arith.constant 0 : index
    %c0_2 = arith.constant 0 : index
    %2 = vector.load %arg2[%c0_1, %c0_2] : memref<392x128xbf16, #tpu.memory_space<vmem>>, vector<392x128xbf16>
    %3 = arith.extf %2 : vector<392x128xbf16> to vector<392x128xf32>
    %4 = arith.subf %1, %3 : vector<392x128xf32>
    %5 = math.absf %4 : vector<392x128xf32>
    %cst = arith.constant dense<0.000000e+00> : vector<128xf32>
    %6 = vector.multi_reduction <add>, %5, %cst [0] : vector<392x128xf32> to vector<128xf32>
    %7 = vector.shape_cast %6 : vector<128xf32> to vector<1x1x128xf32>
    %c0_3 = arith.constant 0 : index
    %c0_4 = arith.constant 0 : index
    %c0_5 = arith.constant 0 : index
    %8 = vector.load %arg3[%c0_3, %c0_4, %c0_5] : memref<1x1x128xf32, #tpu.memory_space<vmem>>, vector<1x1x128xf32>
    tpu.vector_store %arg3[%c0_3, %c0_4, %c0_5], %7 {strides = array<i32>} : memref<1x1x128xf32, #tpu.memory_space<vmem>>, vector<1x1x128xf32>,
    return
  }
  func.func @transform_0(%arg0: i32) -> (i32, i32) {
    %c0_i32 = arith.constant 0 : i32
    %c0_i32_0 = arith.constant 0 : i32
    return %arg0, %c0_i32 : i32, i32
  }
  func.func @transform_1(%arg0: i32) -> (i32, i32) {
    %c0_i32 = arith.constant 0 : i32
    %c0_i32_0 = arith.constant 0 : i32
    return %arg0, %c0_i32 : i32, i32
  }
  func.func @transform_2(%arg0: i32) -> (i32, i32, i32) {
    %c0_i32 = arith.constant 0 : i32
    %c0_i32_0 = arith.constant 0 : i32
    %c0_i32_1 = arith.constant 0 : i32
    return %arg0, %c0_i32, %c0_i32_0 : i32, i32, i32
  }
}

</mosaic_0001>

<llo_original>
// kernel: _lambda_.1
$region0: #{_lambda_.1}
  #allocation0 [shape = 'u32[]', space=smem, size = 0x4, offset = 0x4, fixed_abs, tag = 'smem constant byte address 0x4 - core index']
  #allocation1 [shape = 'u32[72,128]{1,0:T(1,128)}', space=vmem, size = 0x9000, scoped, tag = 'internal scratch']
  %s0 = inlined_call_operand.vmem [shape: bf16[16464,128], index: 0, kind: input, shape index: {}]
  %s1 = inlined_call_operand.vmem [shape: bf16[16464,128], index: 1, kind: input, shape index: {}]
  %s2 = inlined_call_operand.vmem [shape: f32[42,1,128], index: 2, kind: output, shape index: {}]
  %s3 = sld [smem:[#allocation0]]
  $region41: #{_lambda_.1} parent=0
    _
  %s5 = ssub.s32 1, %s3
  %s6 = scalar_select 0, %s5, %s3
  loop: start=0, step=1, limit=44
  $region2: #{_lambda_.1} parent=0 // loop_pre_header
    _
  $region3: #{_lambda_.1} parent=0 // loop_header
    %s8 = sphi 0, %s12
    %p9 = scmp.ge.s32.totalorder %s8, 44
    %s18 = sphi 0, %s20
    %s21 = sphi 0, %s18
    %s22 = sphi 0, %s21
    %s38 = sphi 0, %s22
    %s44 = sphi 0, %s46
    %s47 = sphi 0, %s44
    %s48 = sphi 0, %s47
    %s64 = sphi 0, %s48
    %s70 = sphi 0, %s72
    %s73 = sphi 0, %s70
    %s74 = sphi 0, %s73
    %s90 = sphi 0, %s74
  $region4: #{_lambda_.1} parent=0 // loop_header_branch
    %11 = sbr.rel (%p9) target = $region8
  $region5: #{_lambda_.1} parent=0 // loop_body
    %s13 = ssub.s32 %s8, 1
    %s14 = ssub.s32 %s8, 2
    %s15 = sadd.s32 %s8, 1
    %s16 = ssub.s32 %s8, %s15
    %p17 = scmp.eq.s32.totalorder %s16, 0
    %s19 = sadd.s32 %s18, 1
    %s20 = scalar_select %p17, %s18, %s19
    %p23 = pneg %p17
    %p24 = scmp.eq.s32.totalorder %s8, 41
    %p25 = por %p23, %p24
    %p26 = scmp.ne.s32.totalorder %s18, %s21
    %p27 = scmp.eq.s32.totalorder %s8, 0
    %p28 = por %p26, %p27
    %p29 = scmp.ne.s32.totalorder %s18, %s21
    %p30 = scmp.eq.s32.totalorder %s13, 41
    %p31 = por %p29, %p30
    %p32 = scmp.ne.s32.totalorder %s21, %s22
    %p33 = scmp.eq.s32.totalorder %s13, 0
    %p34 = por %p32, %p33
    %p35 = scmp.ne.s32.totalorder %s21, %s22
    %p36 = scmp.eq.s32.totalorder %s14, 41
    %p37 = por %p35, %p36
    %p39 = scmp.ne.s32.totalorder %s22, %s38
    %p40 = scmp.eq.s32.totalorder %s14, 0
    %p41 = por %p39, %p40
    %s42 = ssub.s32 %s8, %s15
    %p43 = scmp.eq.s32.totalorder %s42, 0
    %s45 = sadd.s32 %s44, 1
    %s46 = scalar_select %p43, %s44, %s45
    %p49 = pneg %p43
    %p50 = scmp.eq.s32.totalorder %s8, 41
    %p51 = por %p49, %p50
    %p52 = scmp.ne.s32.totalorder %s44, %s47
    %p53 = scmp.eq.s32.totalorder %s8, 0
    %p54 = por %p52, %p53
    %p55 = scmp.ne.s32.totalorder %s44, %s47
    %p56 = scmp.eq.s32.totalorder %s13, 41
    %p57 = por %p55, %p56
    %p58 = scmp.ne.s32.totalorder %s47, %s48
    %p59 = scmp.eq.s32.totalorder %s13, 0
    %p60 = por %p58, %p59
    %p61 = scmp.ne.s32.totalorder %s47, %s48
    %p62 = scmp.eq.s32.totalorder %s14, 41
    %p63 = por %p61, %p62
    %p65 = scmp.ne.s32.totalorder %s48, %s64
    %p66 = scmp.eq.s32.totalorder %s14, 0
    %p67 = por %p65, %p66
    %s68 = ssub.s32 %s8, %s15
    %p69 = scmp.eq.s32.totalorder %s68, 0
    %s71 = sadd.s32 %s70, 1
    %s72 = scalar_select %p69, %s70, %s71
    %p75 = pneg %p69
    %p76 = scmp.eq.s32.totalorder %s8, 41
    %p77 = por %p75, %p76
    %p78 = scmp.ne.s32.totalorder %s70, %s73
    %p79 = scmp.eq.s32.totalorder %s8, 0
    %p80 = por %p78, %p79
    %p81 = scmp.ne.s32.totalorder %s70, %s73
    %p82 = scmp.eq.s32.totalorder %s13, 41
    %p83 = por %p81, %p82
    %p84 = scmp.ne.s32.totalorder %s73, %s74
    %p85 = scmp.eq.s32.totalorder %s13, 0
    %p86 = por %p84, %p85
    %p87 = scmp.ne.s32.totalorder %s73, %s74
    %p88 = scmp.eq.s32.totalorder %s14, 41
    %p89 = por %p87, %p88
    %p91 = scmp.ne.s32.totalorder %s74, %s90
    %p92 = scmp.eq.s32.totalorder %s14, 0
    %p93 = por %p91, %p92
    %p94 = scmp.le.s32.totalorder 1, %s8
    %p95 = scmp.lt.s32.totalorder %s8, 43
    %p96 = pnand %p94, %p95
    %p97 = pneg %p96
    // Predicated region
    $region9: #{_lambda_.1} parent=5 // pred_check
      _
    $region10: #{_lambda_.1} parent=5 // pred_check_branch
      %99 = sbr.rel (%p96) target = $region12
    $region11: #{_lambda_.1} parent=5 // pred_region
      %s100 = ssub.s32 %s8, 1
    $region12: #{_lambda_.1} parent=5 // pred_fallthru
      _
    %p101 = scmp.lt.s32.totalorder %s8, 42
    // Predicated region
    $region13: #{_lambda_.1} parent=5 // pred_check
      %p102 = pneg %p101
    $region14: #{_lambda_.1} parent=5 // pred_check_branch
      %104 = sbr.rel (%p102) target = $region16
    $region15: #{_lambda_.1} parent=5 // pred_region
      // Predicated region
      $region17: #{_lambda_.1} parent=15 // pred_check
        %p105 = pneg %p28
      $region18: #{_lambda_.1} parent=15 // pred_check_branch
        %107 = sbr.rel (%p105) target = $region20
      $region19: #{_lambda_.1} parent=15 // pred_region
        %s108 = smul.u32 49, %s8
        %p109 = scmp.lt.s32.totalorder %s108, 2057
        %s110 = scalar_select %p109, %s108, 2057
        %s111 = smul.addr %s110, 4
        %s112 = scalar_lea.vmem %s0, %s111
        %s113 = smul.u32 49, %s8
      $region20: #{_lambda_.1} parent=15 // pred_fallthru
        _
      // Predicated region
      $region21: #{_lambda_.1} parent=15 // pred_check
        %p114 = pneg %p54
      $region22: #{_lambda_.1} parent=15 // pred_check_branch
        %116 = sbr.rel (%p114) target = $region24
      $region23: #{_lambda_.1} parent=15 // pred_region
        %s117 = smul.u32 49, %s8
        %p118 = scmp.lt.s32.totalorder %s117, 2057
        %s119 = scalar_select %p118, %s117, 2057
        %s120 = smul.addr %s119, 4
        %s121 = scalar_lea.vmem %s1, %s120
        %s122 = smul.u32 49, %s8
      $region24: #{_lambda_.1} parent=15 // pred_fallthru
        _
    $region16: #{_lambda_.1} parent=5 // pred_fallthru
      _
    %p123 = scmp.le.s32.totalorder 1, %s8
    %p124 = scmp.lt.s32.totalorder %s8, 43
    %p125 = pnand %p123, %p124
    %p126 = pneg %p125
    // Predicated region
    $region25: #{_lambda_.1} parent=5 // pred_check
      _
    $region26: #{_lambda_.1} parent=5 // pred_check_branch
      %128 = sbr.rel (%p125) target = $region28
    $region27: #{_lambda_.1} parent=5 // pred_region
      %s129 = ssub.s32 %s8, 1
      %s130 = smul.u32 49, %s13
      %p131 = scmp.lt.s32.totalorder %s130, 2057
      %s132 = scalar_select %p131, %s130, 2057
      %s133 = smul.addr %s132, 4
      %s134 = scalar_lea.vmem %s0, %s133
      %p135 = pneg %p34
      %p136 = pneg %p31
      %s137 = smul.u32 49, %s13
      %p138 = scmp.lt.s32.totalorder %s137, 2057
      %s139 = scalar_select %p138, %s137, 2057
      %s140 = smul.addr %s139, 4
      %s141 = scalar_lea.vmem %s1, %s140
      %p142 = pneg %p60
      %p143 = pneg %p57
      %p144 = pneg %p86
      %p145 = pneg %p83
      %p146 = scmp.lt.s32.totalorder %s13, 41
      %s147 = scalar_select %p146, %s13, 41
      %s148 = scalar_lea.vmem %s2, %s147
      %s149 = smul.u32 49, %s13
      %p150 = scmp.lt.s32.totalorder %s149, 2057
      %s151 = scalar_select %p150, %s149, 2057
      %s152 = smul.addr %s151, 4
      %s153 = scalar_lea.vmem %s0, %s152
      %s154 = smul.u32 49, %s13
      %s155 = smul.u32 49, %s13
      %p156 = scmp.lt.s32.totalorder %s155, 2057
      %s157 = scalar_select %p156, %s155, 2057
      %s158 = smul.addr %s157, 4
      %s159 = scalar_lea.vmem %s1, %s158
      %s160 = smul.u32 49, %s13
      %p161 = scmp.lt.s32.totalorder %s13, 41
      %s162 = scalar_select %p161, %s13, 41
      %s163 = scalar_lea.vmem %s2, %s162
      %v164 = vld [vmem:[%s153] sm:$0xf]
      %v165 = vld [vmem:[%s153 + $0x4] sm:$0xf]
      %v166 = vld [vmem:[%s153 + $0x8] sm:$0xf]
      %v167 = vld [vmem:[%s153 + $0xc] sm:$0xf]
      %v168 = vld [vmem:[%s153 + $0x10] sm:$0xf]
      %v169 = vld [vmem:[%s153 + $0x14] sm:$0xf]
      %v170 = vld [vmem:[%s153 + $0x18] sm:$0xf]
      %v171 = vld [vmem:[%s153 + $0x1c] sm:$0xf]
      %v172 = vld [vmem:[%s153 + $0x20] sm:$0xf]
      %v173 = vld [vmem:[%s153 + $0x24] sm:$0xf]
      %v174 = vld [vmem:[%s153 + $0x28] sm:$0xf]
      %v175 = vld [vmem:[%s153 + $0x2c] sm:$0xf]
      %v176 = vld [vmem:[%s153 + $0x30] sm:$0xf]
      %v177 = vld [vmem:[%s153 + $0x34] sm:$0xf]
      %v178 = vld [vmem:[%s153 + $0x38] sm:$0xf]
      %v179 = vld [vmem:[%s153 + $0x3c] sm:$0xf]
      %v180 = vld [vmem:[%s153 + $0x40] sm:$0xf]
      %v181 = vld [vmem:[%s153 + $0x44] sm:$0xf]
      %v182 = vld [vmem:[%s153 + $0x48] sm:$0xf]
      %v183 = vld [vmem:[%s153 + $0x4c] sm:$0xf]
      %v184 = vld [vmem:[%s153 + $0x50] sm:$0xf]
      %v185 = vld [vmem:[%s153 + $0x54] sm:$0xf]
      %v186 = vld [vmem:[%s153 + $0x58] sm:$0xf]
      %v187 = vld [vmem:[%s153 + $0x5c] sm:$0xf]
      %v188 = vld [vmem:[%s153 + $0x60] sm:$0xf]
      %v189 = vld [vmem:[%s153 + $0x64] sm:$0xf]
      %v190 = vld [vmem:[%s153 + $0x68] sm:$0xf]
      %v191 = vld [vmem:[%s153 + $0x6c] sm:$0xf]
      %v192 = vld [vmem:[%s153 + $0x70] sm:$0xf]
      %v193 = vld [vmem:[%s153 + $0x74] sm:$0xf]
      %v194 = vld [vmem:[%s153 + $0x78] sm:$0xf]
      %v195 = vld [vmem:[%s153 + $0x7c] sm:$0xf]
      %v196 = vld [vmem:[%s153 + $0x80] sm:$0xf]
      %v197 = vld [vmem:[%s153 + $0x84] sm:$0xf]
      %v198 = vld [vmem:[%s153 + $0x88] sm:$0xf]
      %v199 = vld [vmem:[%s153 + $0x8c] sm:$0xf]
      %v200 = vld [vmem:[%s153 + $0x90] sm:$0xf]
      %v201 = vld [vmem:[%s153 + $0x94] sm:$0xf]
      %v202 = vld [vmem:[%s153 + $0x98] sm:$0xf]
      %v203 = vld [vmem:[%s153 + $0x9c] sm:$0xf]
      %v204 = vld [vmem:[%s153 + $0xa0] sm:$0xf]
      %v205 = vld [vmem:[%s153 + $0xa4] sm:$0xf]
      %v206 = vld [vmem:[%s153 + $0xa8] sm:$0xf]
      %v207 = vld [vmem:[%s153 + $0xac] sm:$0xf]
      %v208 = vld [vmem:[%s153 + $0xb0] sm:$0xf]
      %v209 = vld [vmem:[%s153 + $0xb4] sm:$0xf]
      %v210 = vld [vmem:[%s153 + $0xb8] sm:$0xf]
      %v211 = vld [vmem:[%s153 + $0xbc] sm:$0xf]
      %v212 = vld [vmem:[%s153 + $0xc0] sm:$0xf]
      %v213 = vunpack.c.l.bf16 %v164
      %v214 = vunpack.c.l.bf16 %v165
      %v215 = vunpack.c.l.bf16 %v166
      %v216 = vunpack.c.l.bf16 %v167
      %v217 = vunpack.c.l.bf16 %v168
      %v218 = vunpack.c.l.bf16 %v169
      %v219 = vunpack.c.l.bf16 %v170
      %v220 = vunpack.c.l.bf16 %v171
      %v221 = vunpack.c.l.bf16 %v172
      %v222 = vunpack.c.l.bf16 %v173
      %v223 = vunpack.c.l.bf16 %v174
      %v224 = vunpack.c.l.bf16 %v175
      %v225 = vunpack.c.l.bf16 %v176
      %v226 = vunpack.c.l.bf16 %v177
      %v227 = vunpack.c.l.bf16 %v178
      %v228 = vunpack.c.l.bf16 %v179
      %v229 = vunpack.c.l.bf16 %v180
      %v230 = vunpack.c.l.bf16 %v181
      %v231 = vunpack.c.l.bf16 %v182
      %v232 = vunpack.c.l.bf16 %v183
      %v233 = vunpack.c.l.bf16 %v184
      %v234 = vunpack.c.l.bf16 %v185
      %v235 = vunpack.c.l.bf16 %v186
      %v236 = vunpack.c.l.bf16 %v187
      %v237 = vunpack.c.l.bf16 %v188
      %v238 = vunpack.c.l.bf16 %v189
      %v239 = vunpack.c.l.bf16 %v190
      %v240 = vunpack.c.l.bf16 %v191
      %v241 = vunpack.c.l.bf16 %v192
      %v242 = vunpack.c.l.bf16 %v193
      %v243 = vunpack.c.l.bf16 %v194
      %v244 = vunpack.c.l.bf16 %v195
      %v245 = vunpack.c.l.bf16 %v196
      %v246 = vunpack.c.l.bf16 %v197
      %v247 = vunpack.c.l.bf16 %v198
      %v248 = vunpack.c.l.bf16 %v199
      %v249 = vunpack.c.l.bf16 %v200
      %v250 = vunpack.c.l.bf16 %v201
      %v251 = vunpack.c.l.bf16 %v202
      %v252 = vunpack.c.l.bf16 %v203
      %v253 = vunpack.c.l.bf16 %v204
      %v254 = vunpack.c.l.bf16 %v205
      %v255 = vunpack.c.l.bf16 %v206
      %v256 = vunpack.c.l.bf16 %v207
      %v257 = vunpack.c.l.bf16 %v208
      %v258 = vunpack.c.l.bf16 %v209
      %v259 = vunpack.c.l.bf16 %v210
      %v260 = vunpack.c.l.bf16 %v211
      %v261 = vunpack.c.l.bf16 %v212
      %v262 = vld [vmem:[%s159] sm:$0xf]
      %v263 = vld [vmem:[%s159 + $0x4] sm:$0xf]
      %v264 = vld [vmem:[%s159 + $0x8] sm:$0xf]
      %v265 = vld [vmem:[%s159 + $0xc] sm:$0xf]
      %v266 = vld [vmem:[%s159 + $0x10] sm:$0xf]
      %v267 = vld [vmem:[%s159 + $0x14] sm:$0xf]
      %v268 = vld [vmem:[%s159 + $0x18] sm:$0xf]
      %v269 = vld [vmem:[%s159 + $0x1c] sm:$0xf]
      %v270 = vld [vmem:[%s159 + $0x20] sm:$0xf]
      %v271 = vld [vmem:[%s159 + $0x24] sm:$0xf]
      %v272 = vld [vmem:[%s159 + $0x28] sm:$0xf]
      %v273 = vld [vmem:[%s159 + $0x2c] sm:$0xf]
      %v274 = vld [vmem:[%s159 + $0x30] sm:$0xf]
      %v275 = vld [vmem:[%s159 + $0x34] sm:$0xf]
      %v276 = vld [vmem:[%s159 + $0x38] sm:$0xf]
      %v277 = vld [vmem:[%s159 + $0x3c] sm:$0xf]
      %v278 = vld [vmem:[%s159 + $0x40] sm:$0xf]
      %v279 = vld [vmem:[%s159 + $0x44] sm:$0xf]
      %v280 = vld [vmem:[%s159 + $0x48] sm:$0xf]
      %v281 = vld [vmem:[%s159 + $0x4c] sm:$0xf]
      %v282 = vld [vmem:[%s159 + $0x50] sm:$0xf]
      %v283 = vld [vmem:[%s159 + $0x54] sm:$0xf]
      %v284 = vld [vmem:[%s159 + $0x58] sm:$0xf]
      %v285 = vld [vmem:[%s159 + $0x5c] sm:$0xf]
      %v286 = vld [vmem:[%s159 + $0x60] sm:$0xf]
      %v287 = vld [vmem:[%s159 + $0x64] sm:$0xf]
      %v288 = vld [vmem:[%s159 + $0x68] sm:$0xf]
      %v289 = vld [vmem:[%s159 + $0x6c] sm:$0xf]
      %v290 = vld [vmem:[%s159 + $0x70] sm:$0xf]
      %v291 = vld [vmem:[%s159 + $0x74] sm:$0xf]
      %v292 = vld [vmem:[%s159 + $0x78] sm:$0xf]
      %v293 = vld [vmem:[%s159 + $0x7c] sm:$0xf]
      %v294 = vld [vmem:[%s159 + $0x80] sm:$0xf]
      %v295 = vld [vmem:[%s159 + $0x84] sm:$0xf]
      %v296 = vld [vmem:[%s159 + $0x88] sm:$0xf]
      %v297 = vld [vmem:[%s159 + $0x8c] sm:$0xf]
      %v298 = vld [vmem:[%s159 + $0x90] sm:$0xf]
      %v299 = vld [vmem:[%s159 + $0x94] sm:$0xf]
      %v300 = vld [vmem:[%s159 + $0x98] sm:$0xf]
      %v301 = vld [vmem:[%s159 + $0x9c] sm:$0xf]
      %v302 = vld [vmem:[%s159 + $0xa0] sm:$0xf]
      %v303 = vld [vmem:[%s159 + $0xa4] sm:$0xf]
      %v304 = vld [vmem:[%s159 + $0xa8] sm:$0xf]
      %v305 = vld [vmem:[%s159 + $0xac] sm:$0xf]
      %v306 = vld [vmem:[%s159 + $0xb0] sm:$0xf]
      %v307 = vld [vmem:[%s159 + $0xb4] sm:$0xf]
      %v308 = vld [vmem:[%s159 + $0xb8] sm:$0xf]
      %v309 = vld [vmem:[%s159 + $0xbc] sm:$0xf]
      %v310 = vld [vmem:[%s159 + $0xc0] sm:$0xf]
      %v311 = vunpack.c.l.bf16 %v262
      %v312 = vunpack.c.l.bf16 %v263
      %v313 = vunpack.c.l.bf16 %v264
      %v314 = vunpack.c.l.bf16 %v265
      %v315 = vunpack.c.l.bf16 %v266
      %v316 = vunpack.c.l.bf16 %v267
      %v317 = vunpack.c.l.bf16 %v268
      %v318 = vunpack.c.l.bf16 %v269
      %v319 = vunpack.c.l.bf16 %v270
      %v320 = vunpack.c.l.bf16 %v271
      %v321 = vunpack.c.l.bf16 %v272
      %v322 = vunpack.c.l.bf16 %v273
      %v323 = vunpack.c.l.bf16 %v274
      %v324 = vunpack.c.l.bf16 %v275
      %v325 = vunpack.c.l.bf16 %v276
      %v326 = vunpack.c.l.bf16 %v277
      %v327 = vunpack.c.l.bf16 %v278
      %v328 = vunpack.c.l.bf16 %v279
      %v329 = vunpack.c.l.bf16 %v280
      %v330 = vunpack.c.l.bf16 %v281
      %v331 = vunpack.c.l.bf16 %v282
      %v332 = vunpack.c.l.bf16 %v283
      %v333 = vunpack.c.l.bf16 %v284
      %v334 = vunpack.c.l.bf16 %v285
      %v335 = vunpack.c.l.bf16 %v286
      %v336 = vunpack.c.l.bf16 %v287
      %v337 = vunpack.c.l.bf16 %v288
      %v338 = vunpack.c.l.bf16 %v289
      %v339 = vunpack.c.l.bf16 %v290
      %v340 = vunpack.c.l.bf16 %v291
      %v341 = vunpack.c.l.bf16 %v292
      %v342 = vunpack.c.l.bf16 %v293
      %v343 = vunpack.c.l.bf16 %v294
      %v344 = vunpack.c.l.bf16 %v295
      %v345 = vunpack.c.l.bf16 %v296
      %v346 = vunpack.c.l.bf16 %v297
      %v347 = vunpack.c.l.bf16 %v298
      %v348 = vunpack.c.l.bf16 %v299
      %v349 = vunpack.c.l.bf16 %v300
      %v350 = vunpack.c.l.bf16 %v301
      %v351 = vunpack.c.l.bf16 %v302
      %v352 = vunpack.c.l.bf16 %v303
      %v353 = vunpack.c.l.bf16 %v304
      %v354 = vunpack.c.l.bf16 %v305
      %v355 = vunpack.c.l.bf16 %v306
      %v356 = vunpack.c.l.bf16 %v307
      %v357 = vunpack.c.l.bf16 %v308
      %v358 = vunpack.c.l.bf16 %v309
      %v359 = vunpack.c.l.bf16 %v310
      %v360 = vsub.f32 %v213, %v311
      %v361 = vsub.f32 %v214, %v312
      %v362 = vsub.f32 %v215, %v313
      %v363 = vsub.f32 %v216, %v314
      %v364 = vsub.f32 %v217, %v315
      %v365 = vsub.f32 %v218, %v316
      %v366 = vsub.f32 %v219, %v317
      %v367 = vsub.f32 %v220, %v318
      %v368 = vsub.f32 %v221, %v319
      %v369 = vsub.f32 %v222, %v320
      %v370 = vsub.f32 %v223, %v321
      %v371 = vsub.f32 %v224, %v322
      %v372 = vsub.f32 %v225, %v323
      %v373 = vsub.f32 %v226, %v324
      %v374 = vsub.f32 %v227, %v325
      %v375 = vsub.f32 %v228, %v326
      %v376 = vsub.f32 %v229, %v327
      %v377 = vsub.f32 %v230, %v328
      %v378 = vsub.f32 %v231, %v329
      %v379 = vsub.f32 %v232, %v330
      %v380 = vsub.f32 %v233, %v331
      %v381 = vsub.f32 %v234, %v332
      %v382 = vsub.f32 %v235, %v333
      %v383 = vsub.f32 %v236, %v334
      %v384 = vsub.f32 %v237, %v335
      %v385 = vsub.f32 %v238, %v336
      %v386 = vsub.f32 %v239, %v337
      %v387 = vsub.f32 %v240, %v338
      %v388 = vsub.f32 %v241, %v339
      %v389 = vsub.f32 %v242, %v340
      %v390 = vsub.f32 %v243, %v341
      %v391 = vsub.f32 %v244, %v342
      %v392 = vsub.f32 %v245, %v343
      %v393 = vsub.f32 %v246, %v344
      %v394 = vsub.f32 %v247, %v345
      %v395 = vsub.f32 %v248, %v346
      %v396 = vsub.f32 %v249, %v347
      %v397 = vsub.f32 %v250, %v348
      %v398 = vsub.f32 %v251, %v349
      %v399 = vsub.f32 %v252, %v350
      %v400 = vsub.f32 %v253, %v351
      %v401 = vsub.f32 %v254, %v352
      %v402 = vsub.f32 %v255, %v353
      %v403 = vsub.f32 %v256, %v354
      %v404 = vsub.f32 %v257, %v355
      %v405 = vsub.f32 %v258, %v356
      %v406 = vsub.f32 %v259, %v357
      %v407 = vsub.f32 %v260, %v358
      %v408 = vsub.f32 %v261, %v359
      %v409 = vand.u32 2147483647, %v360
      %v410 = vand.u32 2147483647, %v361
      %v411 = vand.u32 2147483647, %v362
      %v412 = vand.u32 2147483647, %v363
      %v413 = vand.u32 2147483647, %v364
      %v414 = vand.u32 2147483647, %v365
      %v415 = vand.u32 2147483647, %v366
      %v416 = vand.u32 2147483647, %v367
      %v417 = vand.u32 2147483647, %v368
      %v418 = vand.u32 2147483647, %v369
      %v419 = vand.u32 2147483647, %v370
      %v420 = vand.u32 2147483647, %v371
      %v421 = vand.u32 2147483647, %v372
      %v422 = vand.u32 2147483647, %v373
      %v423 = vand.u32 2147483647, %v374
      %v424 = vand.u32 2147483647, %v375
      %v425 = vand.u32 2147483647, %v376
      %v426 = vand.u32 2147483647, %v377
      %v427 = vand.u32 2147483647, %v378
      %v428 = vand.u32 2147483647, %v379
      %v429 = vand.u32 2147483647, %v380
      %v430 = vand.u32 2147483647, %v381
      %v431 = vand.u32 2147483647, %v382
      %v432 = vand.u32 2147483647, %v383
      %v433 = vand.u32 2147483647, %v384
      %v434 = vand.u32 2147483647, %v385
      %v435 = vand.u32 2147483647, %v386
      %v436 = vand.u32 2147483647, %v387
      %v437 = vand.u32 2147483647, %v388
      %v438 = vand.u32 2147483647, %v389
      %v439 = vand.u32 2147483647, %v390
      %v440 = vand.u32 2147483647, %v391
      %v441 = vand.u32 2147483647, %v392
      %v442 = vand.u32 2147483647, %v393
      %v443 = vand.u32 2147483647, %v394
      %v444 = vand.u32 2147483647, %v395
      %v445 = vand.u32 2147483647, %v396
      %v446 = vand.u32 2147483647, %v397
      %v447 = vand.u32 2147483647, %v398
      %v448 = vand.u32 2147483647, %v399
      %v449 = vand.u32 2147483647, %v400
      %v450 = vand.u32 2147483647, %v401
      %v451 = vand.u32 2147483647, %v402
      %v452 = vand.u32 2147483647, %v403
      %v453 = vand.u32 2147483647, %v404
      %v454 = vand.u32 2147483647, %v405
      %v455 = vand.u32 2147483647, %v406
      %v456 = vand.u32 2147483647, %v407
      %v457 = vand.u32 2147483647, %v408
      %v458 = vadd.f32 %v409, %v410
      %v459 = vadd.f32 %v458, %v411
      %v460 = vadd.f32 %v459, %v412
      %v461 = vadd.f32 %v460, %v413
      %v462 = vadd.f32 %v461, %v414
      %v463 = vadd.f32 %v462, %v415
      %v464 = vadd.f32 %v463, %v416
      %v465 = vadd.f32 %v464, %v417
      %v466 = vadd.f32 %v465, %v418
      %v467 = vadd.f32 %v466, %v419
      %v468 = vadd.f32 %v467, %v420
      %v469 = vadd.f32 %v468, %v421
      %v470 = vadd.f32 %v469, %v422
      %v471 = vadd.f32 %v470, %v423
      %v472 = vadd.f32 %v471, %v424
      %v473 = vadd.f32 %v472, %v425
      %v474 = vadd.f32 %v473, %v426
      %v475 = vadd.f32 %v474, %v427
      %v476 = vadd.f32 %v475, %v428
      %v477 = vadd.f32 %v476, %v429
      %v478 = vadd.f32 %v477, %v430
      %v479 = vadd.f32 %v478, %v431
      %v480 = vadd.f32 %v479, %v432
      %v481 = vadd.f32 %v480, %v433
      %v482 = vadd.f32 %v481, %v434
      %v483 = vadd.f32 %v482, %v435
      %v484 = vadd.f32 %v483, %v436
      %v485 = vadd.f32 %v484, %v437
      %v486 = vadd.f32 %v485, %v438
      %v487 = vadd.f32 %v486, %v439
      %v488 = vadd.f32 %v487, %v440
      %v489 = vadd.f32 %v488, %v441
      %v490 = vadd.f32 %v489, %v442
      %v491 = vadd.f32 %v490, %v443
      %v492 = vadd.f32 %v491, %v444
      %v493 = vadd.f32 %v492, %v445
      %v494 = vadd.f32 %v493, %v446
      %v495 = vadd.f32 %v494, %v447
      %v496 = vadd.f32 %v495, %v448
      %v497 = vadd.f32 %v496, %v449
      %v498 = vadd.f32 %v497, %v450
      %v499 = vadd.f32 %v498, %v451
      %v500 = vadd.f32 %v499, %v452
      %v501 = vadd.f32 %v500, %v453
      %v502 = vadd.f32 %v501, %v454
      %v503 = vadd.f32 %v502, %v455
      %v504 = vadd.f32 %v503, %v456
      %v505 = vadd.f32 %v504, %v457
      %v506 = vrot.slane %v505, 4
      %v507 = vadd.f32 %v505, %v506
      %v508 = vrot.slane %v507, 2
      %v509 = vadd.f32 %v507, %v508
      %v510 = vrot.slane %v509, 1
      %v511 = vadd.f32 %v509, %v510
      %512 = vst [vmem:[%s163] sm:$0x1] %v511
      %p513 = scmp.lt.s32.totalorder %s13, 41
      %s514 = scalar_select %p513, %s13, 41
      %s515 = scalar_lea.vmem %s2, %s514
      // Predicated region
      $region29: #{_lambda_.1} parent=27 // pred_check
        %p516 = pneg %p83
      $region30: #{_lambda_.1} parent=27 // pred_check_branch
        %518 = sbr.rel (%p516) target = $region32
      $region31: #{_lambda_.1} parent=27 // pred_region
        _
      $region32: #{_lambda_.1} parent=27 // pred_fallthru
        _
    $region28: #{_lambda_.1} parent=5 // pred_fallthru
      _
    %p519 = scmp.le.s32.totalorder 2, %s8
    // Predicated region
    $region33: #{_lambda_.1} parent=5 // pred_check
      %p520 = pneg %p519
    $region34: #{_lambda_.1} parent=5 // pred_check_branch
      %522 = sbr.rel (%p520) target = $region36
    $region35: #{_lambda_.1} parent=5 // pred_region
      %s523 = ssub.s32 %s8, 2
      // Predicated region
      $region37: #{_lambda_.1} parent=35 // pred_check
        %p524 = pneg %p89
      $region38: #{_lambda_.1} parent=35 // pred_check_branch
        %526 = sbr.rel (%p524) target = $region40
      $region39: #{_lambda_.1} parent=35 // pred_region
        %p527 = scmp.lt.s32.totalorder %s14, 41
        %s528 = scalar_select %p527, %s14, 41
        %s529 = scalar_lea.vmem %s2, %s528
      $region40: #{_lambda_.1} parent=35 // pred_fallthru
        _
    $region36: #{_lambda_.1} parent=5 // pred_fallthru
      _
  $region6: #{_lambda_.1} parent=0 // loop_footer
    %s12 = sadd.s32 1, %s8
  $region7: #{_lambda_.1} parent=0 // loop_footer_branch
    %7 = sbr.rel target = $region3
  $region8: #{_lambda_.1} parent=0 // loop_exit
    _

</llo_original>
